<compile_context>
chip_gen: v6e
topology: v6e:2x2x1
jax: 0.10.0
libtpu: 0.0.40
codegen_flags: <defaults>
</compile_context>

<pallas_src>
import functools

import jax
import jax.numpy as jnp
from jax.experimental import pallas as pl
from jax.experimental.pallas import tpu as pltpu


def _round_up(n, m):
    return (n + m - 1) // m * m


# Bias-pack lane offsets (each field starts on a 128-lane / vreg boundary).
_B1_LANE = 0     # b1 column, rows 0:64
_B2_LANE = 128   # b2 column, rows 0:64
_B3_LANE = 256   # b3 column, rows 0:32
_W4_LANE = 384   # final-layer weight column, rows 0:32
_B4_LANE = 512   # final-layer bias, row 0
_BPK_LANES = 640


def mlp_kernel(x_ref, w_ref, b_ref, o_ref, *, f_pad, off2, off3):
    """Batch-in-lanes MLP tile.

    x_ref: [f_pad, TM] bf16 (features on sublanes, batch on lanes)
    w_ref: [64, W_LANES] bf16 packed: w1^T @ lane 0, w2^T @ off2, w3^T @ off3
    b_ref: [64, 640] f32 packed bias/w4 columns
    o_ref: [1, TM] f32 (lane-dense output row)
    """
    xt = x_ref[...]  # [f_pad, TM] bf16

    # Layer 1: [64, f_pad] @ [f_pad, TM] -> [64, TM], f32 accumulation.
    h = jnp.dot(w_ref[:, 0:f_pad], xt, preferred_element_type=jnp.float32)
    h = jnp.maximum(h + b_ref[:, _B1_LANE:_B1_LANE + 1], 0.0)

    # Layer 2: [64, 64] @ [64, TM] -> [64, TM].
    h = jnp.dot(w_ref[:, off2:off2 + 64], h.astype(jnp.bfloat16),
                preferred_element_type=jnp.float32)
    h = jnp.maximum(h + b_ref[:, _B2_LANE:_B2_LANE + 1], 0.0)

    # Layer 3: [32, 64] @ [64, TM] -> [32, TM].
    h = jnp.dot(w_ref[0:32, off3:off3 + 64], h.astype(jnp.bfloat16),
                preferred_element_type=jnp.float32)
    h = jnp.maximum(h + b_ref[0:32, _B3_LANE:_B3_LANE + 1], 0.0)

    # Layer 4: [32, TM] -> [1, TM] via VPU multiply + sublane reduce (f32).
    y = jnp.sum(h * b_ref[0:32, _W4_LANE:_W4_LANE + 1], axis=0, keepdims=True)
    y = y + b_ref[0:1, _B4_LANE:_B4_LANE + 1]
    o_ref[...] = y.astype(o_ref.dtype)


def _pack_params(params, f, f_pad, off2, off3, w_lanes):
    """Pack w1^T/w2^T/w3^T (bf16) and b1/b2/b3/w4/b4 (f32) into two operands."""
    wpk = jnp.zeros((64, w_lanes), jnp.bfloat16)
    wpk = wpk.at[:, 0:f].set(params["w1"].T.astype(jnp.bfloat16))
    wpk = wpk.at[:, off2:off2 + 64].set(params["w2"].T.astype(jnp.bfloat16))
    wpk = wpk.at[0:32, off3:off3 + 64].set(params["w3"].T.astype(jnp.bfloat16))

    bpk = jnp.zeros((64, _BPK_LANES), jnp.float32)
    bpk = bpk.at[:, _B1_LANE:_B1_LANE + 1].set(params["b1"].reshape(64, 1))
    bpk = bpk.at[:, _B2_LANE:_B2_LANE + 1].set(params["b2"].reshape(64, 1))
    bpk = bpk.at[0:32, _B3_LANE:_B3_LANE + 1].set(params["b3"].reshape(32, 1))
    bpk = bpk.at[0:32, _W4_LANE:_W4_LANE + 1].set(params["w4"].reshape(32, 1))
    bpk = bpk.at[0:1, _B4_LANE:_B4_LANE + 1].set(params["b4"].reshape(1, 1))
    return wpk, bpk


@functools.partial(jax.jit, static_argnames=("tm",))
def iris_classification_forward(x, params, *, tm=8192):
    """x: [B, F] float32. params: weights stored [in, out], biases [1, out]."""
    B, F = x.shape
    F_pad = _round_up(F, 8)
    OFF2 = _round_up(F_pad, 128)        # w2^T lane offset in the weight pack
    OFF3 = OFF2 + 128                   # w3^T lane offset
    W_LANES = _round_up(OFF3 + 64, 128)

    # Batch tile along the lane dimension: multiple of 128 lanes, sized so the
    # grid has >= 2 steps whenever possible (v7x: shard across both TCs).
    tm = max(128, _round_up(tm, 128))
    TM = min(tm, max(128, _round_up(pl.cdiv(B, 2), 128)))
    B_pad = _round_up(B, TM)

    # Batch-in-lanes layout: x^T, zero-padded, bf16 (halves x DMA traffic).
    xt = jnp.pad(x.T.astype(jnp.bfloat16), ((0, F_pad - F), (0, B_pad - B)))

    wpk, bpk = _pack_params(params, F, F_pad, OFF2, OFF3, W_LANES)
    const = lambda i: (0, 0)  # weights/biases resident in VMEM, DMA'd once

    kernel = functools.partial(mlp_kernel, f_pad=F_pad, off2=OFF2, off3=OFF3)
    out_row = pl.pallas_call(
        kernel,
        out_shape=jax.ShapeDtypeStruct((1, B_pad), jnp.float32),
        grid=(B_pad // TM,),
        in_specs=[
            pl.BlockSpec((F_pad, TM), lambda i: (0, i)),   # x tile (pipelined)
            pl.BlockSpec((64, W_LANES), const),            # packed w1^T/w2^T/w3^T (bf16)
            pl.BlockSpec((64, _BPK_LANES), const),         # packed biases + w4 + b4 (f32)
        ],
        out_specs=pl.BlockSpec((1, TM), lambda i: (0, i)),  # lane-dense output row
        compiler_params=pltpu.CompilerParams(
            dimension_semantics=("parallel",)),
    )(xt, wpk, bpk)

    return out_row[0, :B].reshape(B, 1)


def init_params(key, max_features):
    """Deterministic init mimicking PyTorch nn.Linear default
    (uniform(-1/sqrt(fan_in), 1/sqrt(fan_in))). Weights stored [in, out]."""
    dims = [(max_features, 64), (64, 64), (64, 32), (32, 1)]
    params = {}
    for i, (fan_in, fan_out) in enumerate(dims, start=1):
        key, kw, kb = jax.random.split(key, 3)
        bound = 1.0 / jnp.sqrt(jnp.float32(fan_in))
        params[f"w{i}"] = jax.random.uniform(
            kw, (fan_in, fan_out), jnp.float32, -bound, bound)
        params[f"b{i}"] = jax.random.uniform(
            kb, (1, fan_out), jnp.float32, -bound, bound)
    return params


def reference_forward(x, params, op_dtype=jnp.float32):
    """Pure-JAX reference. op_dtype=bfloat16 mimics the kernel's MXU operand
    precision (f32 accumulation, f32 bias/ReLU, f32 final layer)."""
    c = lambda a: a.astype(op_dtype)
    h = jnp.maximum(jnp.dot(c(x), c(params["w1"]),
                            preferred_element_type=jnp.float32) + params["b1"], 0.0)
    h = jnp.maximum(jnp.dot(c(h), c(params["w2"]),
                            preferred_element_type=jnp.float32) + params["b2"], 0.0)
    h = jnp.maximum(jnp.dot(c(h), c(params["w3"]),
                            preferred_element_type=jnp.float32) + params["b3"], 0.0)
    return jnp.dot(h, params["w4"]) + params["b4"]


if __name__ == "__main__":
    key = jax.random.PRNGKey(0)
    key, kx, kx2 = jax.random.split(key, 3)

    B, F = 8, 4  # iris: 4 features
    params = init_params(key, F)

    # Small batch (single grid step).
    x = jax.random.normal(kx, (B, F), jnp.float32)
    out = jax.block_until_ready(iris_classification_forward(x, params))
    assert out.shape == (B, 1)
    # vs exact f32 reference (loose: kernel uses bf16 MXU operands).
    assert jnp.allclose(out, reference_forward(x, params), atol=5e-2, rtol=5e-2)
    # vs bf16-operand reference (tight: same products, f32 accumulation).
    assert jnp.allclose(out, reference_forward(x, params, jnp.bfloat16),
                        atol=5e-3, rtol=5e-3)

    # Larger batch exercising the batch grid (>= 2 steps) + tail padding path.
    B2 = 1000
    x2 = jax.random.normal(kx2, (B2, F), jnp.float32)
    out2 = jax.block_until_ready(
        iris_classification_forward(x2, params, tm=256))
    assert out2.shape == (B2, 1)
    assert jnp.allclose(out2, reference_forward(x2, params), atol=5e-2, rtol=5e-2)
    assert jnp.allclose(out2, reference_forward(x2, params, jnp.bfloat16),
                        atol=5e-3, rtol=5e-3)

    print("KERNEL_OK")
</pallas_src>

<mosaic_0001>
module attributes {stable_mosaic.version = 11 : i64} {
  func.func @mlp_kernel(%arg0: i32, %arg1: memref<8x128xbf16, #tpu.memory_space<vmem>>, %arg2: memref<64x384xbf16, #tpu.memory_space<vmem>>, %arg3: memref<64x640xf32, #tpu.memory_space<vmem>>, %arg4: memref<1x128xf32, #tpu.memory_space<vmem>>) attributes {dimension_semantics = [#tpu.dimension_semantics<parallel>], iteration_bounds = array<i64: 1>, scalar_prefetch = 0 : i64, scratch_operands = 0 : i64, tpu.core_type = #tpu.core_type<tc>, window_params = [{transform_indices = @transform_0, window_bounds = array<i64: 8, 128>}, {pipeline_mode = #tpu.pipeline_mode<synchronous>, transform_indices = @transform_1, window_bounds = array<i64: 64, 384>}, {pipeline_mode = #tpu.pipeline_mode<synchronous>, transform_indices = @transform_2, window_bounds = array<i64: 64, 640>}, {transform_indices = @transform_3, window_bounds = array<i64: 1, 128>}]} {
    %c0 = arith.constant 0 : index
    %c0_0 = arith.constant 0 : index
    %0 = vector.load %arg1[%c0, %c0_0] : memref<8x128xbf16, #tpu.memory_space<vmem>>, vector<8x128xbf16>
    %c0_1 = arith.constant 0 : index
    %c0_2 = arith.constant 0 : index
    %1 = vector.load %arg2[%c0_1, %c0_2] : memref<64x384xbf16, #tpu.memory_space<vmem>>, vector<64x8xbf16>
    %cst = arith.constant dense<0.000000e+00> : vector<64x128xf32>
    %2 = tpu.matmul %1, %0, %cst {dimension_numbers = #tpu.dot_dimension_numbers<[1], [0], [0], [1], [0, 0, 1, 1], [], []>} : vector<64x8xbf16>, vector<8x128xbf16>, vector<64x128xf32> -> vector<64x128xf32>
    %c0_3 = arith.constant 0 : index
    %c0_4 = arith.constant 0 : index
    %3 = vector.load %arg3[%c0_3, %c0_4] : memref<64x640xf32, #tpu.memory_space<vmem>>, vector<64x1xf32>
    %4 = vector.broadcast %3 : vector<64x1xf32> to vector<64x128xf32>
    %5 = arith.addf %2, %4 : vector<64x128xf32>
    %cst_5 = arith.constant 0.000000e+00 : f32
    %6 = vector.broadcast %cst_5 : f32 to vector<64x128xf32>
    %7 = arith.maximumf %5, %6 : vector<64x128xf32>
    %c0_6 = arith.constant 0 : index
    %c128 = arith.constant 128 : index
    %8 = vector.load %arg2[%c0_6, %c128] : memref<64x384xbf16, #tpu.memory_space<vmem>>, vector<64x64xbf16>
    %9 = arith.truncf %7 : vector<64x128xf32> to vector<64x128xbf16>
    %cst_7 = arith.constant dense<0.000000e+00> : vector<64x128xf32>
    %10 = tpu.matmul %8, %9, %cst_7 {dimension_numbers = #tpu.dot_dimension_numbers<[1], [0], [0], [1], [0, 0, 1, 1], [], []>} : vector<64x64xbf16>, vector<64x128xbf16>, vector<64x128xf32> -> vector<64x128xf32>
    %c0_8 = arith.constant 0 : index
    %c128_9 = arith.constant 128 : index
    %11 = vector.load %arg3[%c0_8, %c128_9] : memref<64x640xf32, #tpu.memory_space<vmem>>, vector<64x1xf32>
    %12 = vector.broadcast %11 : vector<64x1xf32> to vector<64x128xf32>
    %13 = arith.addf %10, %12 : vector<64x128xf32>
    %cst_10 = arith.constant 0.000000e+00 : f32
    %14 = vector.broadcast %cst_10 : f32 to vector<64x128xf32>
    %15 = arith.maximumf %13, %14 : vector<64x128xf32>
    %c0_11 = arith.constant 0 : index
    %c256 = arith.constant 256 : index
    %16 = vector.load %arg2[%c0_11, %c256] : memref<64x384xbf16, #tpu.memory_space<vmem>>, vector<32x64xbf16>
    %17 = arith.truncf %15 : vector<64x128xf32> to vector<64x128xbf16>
    %cst_12 = arith.constant dense<0.000000e+00> : vector<32x128xf32>
    %18 = tpu.matmul %16, %17, %cst_12 {dimension_numbers = #tpu.dot_dimension_numbers<[1], [0], [0], [1], [0, 0, 1, 1], [], []>} : vector<32x64xbf16>, vector<64x128xbf16>, vector<32x128xf32> -> vector<32x128xf32>
    %c0_13 = arith.constant 0 : index
    %c256_14 = arith.constant 256 : index
    %19 = vector.load %arg3[%c0_13, %c256_14] : memref<64x640xf32, #tpu.memory_space<vmem>>, vector<32x1xf32>
    %20 = vector.broadcast %19 : vector<32x1xf32> to vector<32x128xf32>
    %21 = arith.addf %18, %20 : vector<32x128xf32>
    %cst_15 = arith.constant 0.000000e+00 : f32
    %22 = vector.broadcast %cst_15 : f32 to vector<32x128xf32>
    %23 = arith.maximumf %21, %22 : vector<32x128xf32>
    %c0_16 = arith.constant 0 : index
    %c384 = arith.constant 384 : index
    %24 = vector.load %arg3[%c0_16, %c384] : memref<64x640xf32, #tpu.memory_space<vmem>>, vector<32x1xf32>
    %25 = vector.broadcast %24 : vector<32x1xf32> to vector<32x128xf32>
    %26 = arith.mulf %23, %25 : vector<32x128xf32>
    %cst_17 = arith.constant dense<0.000000e+00> : vector<128xf32>
    %27 = vector.multi_reduction <add>, %26, %cst_17 [0] : vector<32x128xf32> to vector<128xf32>
    %28 = vector.shape_cast %27 : vector<128xf32> to vector<1x128xf32>
    %c0_18 = arith.constant 0 : index
    %c512 = arith.constant 512 : index
    %29 = vector.load %arg3[%c0_18, %c512] : memref<64x640xf32, #tpu.memory_space<vmem>>, vector<1x1xf32>
    %30 = vector.broadcast %29 : vector<1x1xf32> to vector<1x128xf32>
    %31 = arith.addf %28, %30 : vector<1x128xf32>
    %c0_19 = arith.constant 0 : index
    %c0_20 = arith.constant 0 : index
    %32 = vector.load %arg4[%c0_19, %c0_20] : memref<1x128xf32, #tpu.memory_space<vmem>>, vector<1x128xf32>
    tpu.vector_store %arg4[%c0_19, %c0_20], %31 {strides = array<i32>} : memref<1x128xf32, #tpu.memory_space<vmem>>, vector<1x128xf32>,
    return
  }
  func.func @transform_0(%arg0: i32) -> (i32, i32) {
    %c0_i32 = arith.constant 0 : i32
    %c0_i32_0 = arith.constant 0 : i32
    return %c0_i32, %arg0 : i32, i32
  }
  func.func @transform_1(%arg0: i32) -> (i32, i32) {
    %c0_i32 = arith.constant 0 : i32
    %c0_i32_0 = arith.constant 0 : i32
    %c0_i32_1 = arith.constant 0 : i32
    return %c0_i32, %c0_i32_0 : i32, i32
  }
  func.func @transform_2(%arg0: i32) -> (i32, i32) {
    %c0_i32 = arith.constant 0 : i32
    %c0_i32_0 = arith.constant 0 : i32
    %c0_i32_1 = arith.constant 0 : i32
    return %c0_i32, %c0_i32_0 : i32, i32
  }
  func.func @transform_3(%arg0: i32) -> (i32, i32) {
    %c0_i32 = arith.constant 0 : i32
    %c0_i32_0 = arith.constant 0 : i32
    return %c0_i32, %arg0 : i32, i32
  }
}

</mosaic_0001>

<llo_original>
// kernel: iris_classification_forward.1
$region0: #{iris_classification_forward.1}
  #allocation0 [shape = 'u32[]', space=smem, size = 0x4, offset = 0x4, fixed_abs, tag = 'smem constant byte address 0x4 - core index']
  #allocation1 [shape = 'u32[144,128]{1,0:T(1,128)}', space=vmem, size = 0x12000, scoped, tag = 'internal scratch']
  %s0 = inlined_call_operand.vmem [shape: bf16[8,128], index: 0, kind: input, shape index: {}]
  %s1 = inlined_call_operand.vmem [shape: bf16[64,384], index: 1, kind: input, shape index: {}]
  %s2 = inlined_call_operand.vmem [shape: f32[64,640], index: 2, kind: input, shape index: {}]
  %s3 = inlined_call_operand.vmem [shape: f32[1,128], index: 3, kind: output, shape index: {}]
  %s4 = sld [smem:[#allocation0]]
  $region22: #{iris_classification_forward.1} parent=0
    _
  %s6 = ssub.s32 1, %s4
  %s7 = scalar_select 0, %s6, %s4
  // Predicated region
  $region2: #{iris_classification_forward.1} parent=0 // pred_check
    _
  $region3: #{iris_classification_forward.1} parent=0 // pred_check_branch
    %9 = sbr.rel (0) target = $region5
  $region4: #{iris_classification_forward.1} parent=0 // pred_region
    _
  $region5: #{iris_classification_forward.1} parent=0 // pred_fallthru
    _
  // Predicated region
  $region6: #{iris_classification_forward.1} parent=0 // pred_check
    _
  $region7: #{iris_classification_forward.1} parent=0 // pred_check_branch
    %11 = sbr.rel (0) target = $region9
  $region8: #{iris_classification_forward.1} parent=0 // pred_region
    _
  $region9: #{iris_classification_forward.1} parent=0 // pred_fallthru
    _
  // Predicated region
  $region10: #{iris_classification_forward.1} parent=0 // pred_check
    _
  $region11: #{iris_classification_forward.1} parent=0 // pred_check_branch
    %13 = sbr.rel (0) target = $region13
  $region12: #{iris_classification_forward.1} parent=0 // pred_region
    _
  $region13: #{iris_classification_forward.1} parent=0 // pred_fallthru
    _
  %v15 = vld [vmem:[%s0] sm:$0xf]
  %v16 = vld [vmem:[%s1] sm:$0xf]
  %v17 = vld [vmem:[%s1 + $0xc] sm:$0xf]
  %v18 = vld [vmem:[%s1 + $0x18] sm:$0xf]
  %v19 = vld [vmem:[%s1 + $0x24] sm:$0xf]
  %v20 = vld [vmem:[%s1 + $0x30] sm:$0xf]
  %v21 = vld [vmem:[%s1 + $0x3c] sm:$0xf]
  %v22 = vld [vmem:[%s1 + $0x48] sm:$0xf]
  %v23 = vld [vmem:[%s1 + $0x54] sm:$0xf]
  %v24 = vld [vmem:[%s2] sm:$0xff]
  %v25 = vld [vmem:[%s2 + $0x28] sm:$0xff]
  %v26 = vld [vmem:[%s2 + $0x50] sm:$0xff]
  %v27 = vld [vmem:[%s2 + $0x78] sm:$0xff]
  %v28 = vld [vmem:[%s2 + $0xa0] sm:$0xff]
  %v29 = vld [vmem:[%s2 + $0xc8] sm:$0xff]
  %v30 = vld [vmem:[%s2 + $0xf0] sm:$0xff]
  %v31 = vld [vmem:[%s2 + $0x118] sm:$0xff]
  %33 = vset.pattern.permute.xlu0 0
  %34 = vperm.xlu0 %33, %v24
  %v35 = vpop.permute.xlu0 %34
  %38 = vset.pattern.permute.xlu0 0
  %39 = vperm.xlu0 %38, %v25
  %v40 = vpop.permute.xlu0 %39
  %43 = vset.pattern.permute.xlu0 0
  %44 = vperm.xlu0 %43, %v26
  %v45 = vpop.permute.xlu0 %44
  %48 = vset.pattern.permute.xlu0 0
  %49 = vperm.xlu0 %48, %v27
  %v50 = vpop.permute.xlu0 %49
  %53 = vset.pattern.permute.xlu0 0
  %54 = vperm.xlu0 %53, %v28
  %v55 = vpop.permute.xlu0 %54
  %58 = vset.pattern.permute.xlu0 0
  %59 = vperm.xlu0 %58, %v29
  %v60 = vpop.permute.xlu0 %59
  %63 = vset.pattern.permute.xlu0 0
  %64 = vperm.xlu0 %63, %v30
  %v65 = vpop.permute.xlu0 %64
  %68 = vset.pattern.permute.xlu0 0
  %69 = vperm.xlu0 %68, %v31
  %v70 = vpop.permute.xlu0 %69
  %v80 = vunpack.c.l.b16 %v16
  %v81 = vunpack.c.l.b16 %v17
  %v82 = vunpack.c.l.b16 %v18
  %v83 = vunpack.c.l.b16 %v19
  %v84 = vunpack.c.l.b16 %v20
  %v85 = vunpack.c.l.b16 %v21
  %v86 = vunpack.c.l.b16 %v22
  %v87 = vunpack.c.l.b16 %v23
  %v88 = vpack.c.b16 %v81, %v80
  %v89 = vpack.c.b16 %v83, %v82
  %v90 = vpack.c.b16 %v85, %v84
  %v91 = vpack.c.b16 %v87, %v86
  %vm92 = vcmask 64512
  %v94 = vsel %vm92, %v88, 0
  %v97 = vsel %vm92, %v89, 0
  %v100 = vsel %vm92, %v90, 0
  %v103 = vsel %vm92, %v91, 0
  %vm105 = vcmask 1043456
  %v107 = vsel %vm105, %v15, 0
  %109 = vmatprep.subr.bf16.mxu0 0
  %110 = vmatpush1.bf16.msra.mxu0 0
  %111 = vmatprep.subr.bf16.mxu0 0
  %112 = vmatpush1.bf16.msra.mxu0 0
  %113 = vmatprep.subr.bf16.mxu0 0
  %114 = vmatpush1.bf16.msra.mxu0 0
  %115 = vmatprep.subr.bf16.mxu0 0
  %116 = vmatpush1.bf16.msra.mxu0 0
  %117 = vmatprep.subr.bf16.mxu0 0
  %118 = vmatpush1.bf16.msra.mxu0 0
  %119 = vmatprep.subr.bf16.mxu0 0
  %120 = vmatpush1.bf16.msra.mxu0 0
  %121 = vmatprep.subr.bf16.mxu0 0
  %122 = vmatpush1.bf16.msra.mxu0 0
  %123 = vmatprep.subr.bf16.mxu0 0
  %124 = vmatpush1.bf16.msra.mxu0 %v107
  %125 = vmatprep.subr.bf16.mxu0 0
  %126 = vmatpush2.bf16.msra.mxu0 0
  %127 = vmatprep.subr.bf16.mxu0 0
  %128 = vmatpush2.bf16.msra.mxu0 0
  %129 = vmatprep.subr.bf16.mxu0 0
  %130 = vmatpush2.bf16.msra.mxu0 0
  %131 = vmatprep.subr.bf16.mxu0 0
  %132 = vmatpush2.bf16.msra.mxu0 0
  %133 = vmatprep.subr.bf16.mxu0 0
  %134 = vmatpush2.bf16.msra.mxu0 0
  %135 = vmatprep.subr.bf16.mxu0 0
  %136 = vmatpush2.bf16.msra.mxu0 0
  %137 = vmatprep.subr.bf16.mxu0 0
  %138 = vmatpush2.bf16.msra.mxu0 0
  %139 = vmatprep.subr.bf16.mxu0 0
  %140 = vmatpush2.bf16.msra.mxu0 0
  %141 = vmatprep.mubr.bf16.mxu0 0
  %142 = vmatmul.mubr.bf16.gmra.mxu0 %v94
  %v143 = vpop.f32.mrf.mxu0
  %v144 = vadd.f32 %v35, %v143
  %v145 = vpop.f32.mrf.mxu0
  %v146 = vpop.f32.mrf.mxu0
  %v147 = vadd.f32 %v40, %v146
  %v148 = vpop.f32.mrf.mxu0
  %149 = vmatprep.mubr.bf16.mxu0 0
  %150 = vmatmul.mubr.bf16.gmra.mxu0 %v97
  %v151 = vpop.f32.mrf.mxu0
  %v152 = vadd.f32 %v45, %v151
  %v153 = vpop.f32.mrf.mxu0
  %v154 = vpop.f32.mrf.mxu0
  %v155 = vadd.f32 %v50, %v154
  %v156 = vpop.f32.mrf.mxu0
  %157 = vmatprep.mubr.bf16.mxu0 0
  %158 = vmatmul.mubr.bf16.gmra.mxu0 %v100
  %v159 = vpop.f32.mrf.mxu0
  %v160 = vadd.f32 %v55, %v159
  %v161 = vpop.f32.mrf.mxu0
  %v162 = vpop.f32.mrf.mxu0
  %v163 = vadd.f32 %v60, %v162
  %v164 = vpop.f32.mrf.mxu0
  %165 = vmatprep.mubr.bf16.mxu0 0
  %166 = vmatmul.mubr.bf16.gmra.mxu0 %v103
  %v167 = vpop.f32.mrf.mxu0
  %v168 = vadd.f32 %v65, %v167
  %v169 = vpop.f32.mrf.mxu0
  %v170 = vpop.f32.mrf.mxu0
  %v171 = vadd.f32 %v70, %v170
  %v172 = vpop.f32.mrf.mxu0
  %173 = vdwg.mxu0
  %v174 = vmax.f32 %v144, 0.0
  %v175 = vmax.f32 %v147, 0.0
  %v176 = vmax.f32 %v152, 0.0
  %v177 = vmax.f32 %v155, 0.0
  %v178 = vmax.f32 %v160, 0.0
  %v179 = vmax.f32 %v163, 0.0
  %v180 = vmax.f32 %v168, 0.0
  %v181 = vmax.f32 %v171, 0.0
  %v182 = vld [vmem:[%s1 + $0x4] sm:$0xf]
  %v183 = vld [vmem:[%s1 + $0x10] sm:$0xf]
  %v184 = vld [vmem:[%s1 + $0x1c] sm:$0xf]
  %v185 = vld [vmem:[%s1 + $0x28] sm:$0xf]
  %v186 = vld [vmem:[%s1 + $0x34] sm:$0xf]
  %v187 = vld [vmem:[%s1 + $0x40] sm:$0xf]
  %v188 = vld [vmem:[%s1 + $0x4c] sm:$0xf]
  %v189 = vld [vmem:[%s1 + $0x58] sm:$0xf]
  %v190 = vpack.c.bf16 %v175, %v174
  %v191 = vpack.c.bf16 %v177, %v176
  %v192 = vpack.c.bf16 %v179, %v178
  %v193 = vpack.c.bf16 %v181, %v180
  %v194 = vld [vmem:[%s2 + $0x8] sm:$0xff]
  %v195 = vld [vmem:[%s2 + $0x30] sm:$0xff]
  %v196 = vld [vmem:[%s2 + $0x58] sm:$0xff]
  %v197 = vld [vmem:[%s2 + $0x80] sm:$0xff]
  %v198 = vld [vmem:[%s2 + $0xa8] sm:$0xff]
  %v199 = vld [vmem:[%s2 + $0xd0] sm:$0xff]
  %v200 = vld [vmem:[%s2 + $0xf8] sm:$0xff]
  %v201 = vld [vmem:[%s2 + $0x120] sm:$0xff]
  %203 = vset.pattern.permute.xlu0 0
  %204 = vperm.xlu0 %203, %v194
  %v205 = vpop.permute.xlu0 %204
  %208 = vset.pattern.permute.xlu0 0
  %209 = vperm.xlu0 %208, %v195
  %v210 = vpop.permute.xlu0 %209
  %213 = vset.pattern.permute.xlu0 0
  %214 = vperm.xlu0 %213, %v196
  %v215 = vpop.permute.xlu0 %214
  %218 = vset.pattern.permute.xlu0 0
  %219 = vperm.xlu0 %218, %v197
  %v220 = vpop.permute.xlu0 %219
  %223 = vset.pattern.permute.xlu0 0
  %224 = vperm.xlu0 %223, %v198
  %v225 = vpop.permute.xlu0 %224
  %228 = vset.pattern.permute.xlu0 0
  %229 = vperm.xlu0 %228, %v199
  %v230 = vpop.permute.xlu0 %229
  %233 = vset.pattern.permute.xlu0 0
  %234 = vperm.xlu0 %233, %v200
  %v235 = vpop.permute.xlu0 %234
  %238 = vset.pattern.permute.xlu0 0
  %239 = vperm.xlu0 %238, %v201
  %v240 = vpop.permute.xlu0 %239
  %v250 = vunpack.c.l.b16 %v182
  %v251 = vunpack.c.l.b16 %v183
  %v252 = vunpack.c.l.b16 %v184
  %v253 = vunpack.c.l.b16 %v185
  %v254 = vunpack.c.l.b16 %v186
  %v255 = vunpack.c.l.b16 %v187
  %v256 = vunpack.c.l.b16 %v188
  %v257 = vunpack.c.l.b16 %v189
  %v258 = vpack.c.b16 %v251, %v250
  %v259 = vpack.c.b16 %v253, %v252
  %v260 = vpack.c.b16 %v255, %v254
  %v261 = vpack.c.b16 %v257, %v256
  %vm262 = vcmask 523264
  %v264 = vsel %vm262, %v258, 0
  %v267 = vsel %vm262, %v259, 0
  %v270 = vsel %vm262, %v260, 0
  %v273 = vsel %vm262, %v261, 0
  %275 = vmatprep.subr.bf16.mxu0 0
  %276 = vmatpush1.bf16.msra.mxu0 0
  %277 = vmatprep.subr.bf16.mxu0 0
  %278 = vmatpush1.bf16.msra.mxu0 0
  %279 = vmatprep.subr.bf16.mxu0 0
  %280 = vmatpush1.bf16.msra.mxu0 0
  %281 = vmatprep.subr.bf16.mxu0 0
  %282 = vmatpush1.bf16.msra.mxu0 0
  %283 = vmatprep.subr.bf16.mxu0 0
  %284 = vmatpush1.bf16.msra.mxu0 %v193
  %285 = vmatprep.subr.bf16.mxu0 0
  %286 = vmatpush1.bf16.msra.mxu0 %v192
  %287 = vmatprep.subr.bf16.mxu0 0
  %288 = vmatpush1.bf16.msra.mxu0 %v191
  %289 = vmatprep.subr.bf16.mxu0 0
  %290 = vmatpush1.bf16.msra.mxu0 %v190
  %291 = vmatprep.subr.bf16.mxu0 0
  %292 = vmatpush2.bf16.msra.mxu0 0
  %293 = vmatprep.subr.bf16.mxu0 0
  %294 = vmatpush2.bf16.msra.mxu0 0
  %295 = vmatprep.subr.bf16.mxu0 0
  %296 = vmatpush2.bf16.msra.mxu0 0
  %297 = vmatprep.subr.bf16.mxu0 0
  %298 = vmatpush2.bf16.msra.mxu0 0
  %299 = vmatprep.subr.bf16.mxu0 0
  %300 = vmatpush2.bf16.msra.mxu0 0
  %301 = vmatprep.subr.bf16.mxu0 0
  %302 = vmatpush2.bf16.msra.mxu0 0
  %303 = vmatprep.subr.bf16.mxu0 0
  %304 = vmatpush2.bf16.msra.mxu0 0
  %305 = vmatprep.subr.bf16.mxu0 0
  %306 = vmatpush2.bf16.msra.mxu0 0
  %307 = vmatprep.mubr.bf16.mxu0 0
  %308 = vmatmul.mubr.bf16.gmra.mxu0 %v264
  %v309 = vpop.f32.mrf.mxu0
  %v310 = vadd.f32 %v205, %v309
  %v311 = vpop.f32.mrf.mxu0
  %v312 = vpop.f32.mrf.mxu0
  %v313 = vadd.f32 %v210, %v312
  %v314 = vpop.f32.mrf.mxu0
  %315 = vmatprep.mubr.bf16.mxu0 0
  %316 = vmatmul.mubr.bf16.gmra.mxu0 %v267
  %v317 = vpop.f32.mrf.mxu0
  %v318 = vadd.f32 %v215, %v317
  %v319 = vpop.f32.mrf.mxu0
  %v320 = vpop.f32.mrf.mxu0
  %v321 = vadd.f32 %v220, %v320
  %v322 = vpop.f32.mrf.mxu0
  %323 = vmatprep.mubr.bf16.mxu0 0
  %324 = vmatmul.mubr.bf16.gmra.mxu0 %v270
  %v325 = vpop.f32.mrf.mxu0
  %v326 = vadd.f32 %v225, %v325
  %v327 = vpop.f32.mrf.mxu0
  %v328 = vpop.f32.mrf.mxu0
  %v329 = vadd.f32 %v230, %v328
  %v330 = vpop.f32.mrf.mxu0
  %331 = vmatprep.mubr.bf16.mxu0 0
  %332 = vmatmul.mubr.bf16.gmra.mxu0 %v273
  %v333 = vpop.f32.mrf.mxu0
  %v334 = vadd.f32 %v235, %v333
  %v335 = vpop.f32.mrf.mxu0
  %v336 = vpop.f32.mrf.mxu0
  %v337 = vadd.f32 %v240, %v336
  %v338 = vpop.f32.mrf.mxu0
  %339 = vdwg.mxu0
  %v340 = vmax.f32 %v310, 0.0
  %v341 = vmax.f32 %v313, 0.0
  %v342 = vmax.f32 %v318, 0.0
  %v343 = vmax.f32 %v321, 0.0
  %v344 = vmax.f32 %v326, 0.0
  %v345 = vmax.f32 %v329, 0.0
  %v346 = vmax.f32 %v334, 0.0
  %v347 = vmax.f32 %v337, 0.0
  %v348 = vld [vmem:[%s1 + $0x8] sm:$0xf]
  %v349 = vld [vmem:[%s1 + $0x14] sm:$0xf]
  %v350 = vld [vmem:[%s1 + $0x20] sm:$0xf]
  %v351 = vld [vmem:[%s1 + $0x2c] sm:$0xf]
  %v352 = vpack.c.bf16 %v341, %v340
  %v353 = vpack.c.bf16 %v343, %v342
  %v354 = vpack.c.bf16 %v345, %v344
  %v355 = vpack.c.bf16 %v347, %v346
  %v356 = vld [vmem:[%s2 + $0x10] sm:$0xff]
  %v357 = vld [vmem:[%s2 + $0x38] sm:$0xff]
  %v358 = vld [vmem:[%s2 + $0x60] sm:$0xff]
  %v359 = vld [vmem:[%s2 + $0x88] sm:$0xff]
  %361 = vset.pattern.permute.xlu0 0
  %362 = vperm.xlu0 %361, %v356
  %v363 = vpop.permute.xlu0 %362
  %366 = vset.pattern.permute.xlu0 0
  %367 = vperm.xlu0 %366, %v357
  %v368 = vpop.permute.xlu0 %367
  %371 = vset.pattern.permute.xlu0 0
  %372 = vperm.xlu0 %371, %v358
  %v373 = vpop.permute.xlu0 %372
  %376 = vset.pattern.permute.xlu0 0
  %377 = vperm.xlu0 %376, %v359
  %v378 = vpop.permute.xlu0 %377
  %v384 = vunpack.c.l.b16 %v348
  %v385 = vunpack.c.l.b16 %v349
  %v386 = vunpack.c.l.b16 %v350
  %v387 = vunpack.c.l.b16 %v351
  %v388 = vpack.c.b16 %v385, %v384
  %v389 = vpack.c.b16 %v387, %v386
  %v391 = vsel %vm262, %v388, 0
  %v394 = vsel %vm262, %v389, 0
  %396 = vmatprep.subr.bf16.mxu0 0
  %397 = vmatpush1.bf16.msra.mxu0 0
  %398 = vmatprep.subr.bf16.mxu0 0
  %399 = vmatpush1.bf16.msra.mxu0 0
  %400 = vmatprep.subr.bf16.mxu0 0
  %401 = vmatpush1.bf16.msra.mxu0 0
  %402 = vmatprep.subr.bf16.mxu0 0
  %403 = vmatpush1.bf16.msra.mxu0 0
  %404 = vmatprep.subr.bf16.mxu0 0
  %405 = vmatpush1.bf16.msra.mxu0 %v355
  %406 = vmatprep.subr.bf16.mxu0 0
  %407 = vmatpush1.bf16.msra.mxu0 %v354
  %408 = vmatprep.subr.bf16.mxu0 0
  %409 = vmatpush1.bf16.msra.mxu0 %v353
  %410 = vmatprep.subr.bf16.mxu0 0
  %411 = vmatpush1.bf16.msra.mxu0 %v352
  %412 = vmatprep.subr.bf16.mxu0 0
  %413 = vmatpush2.bf16.msra.mxu0 0
  %414 = vmatprep.subr.bf16.mxu0 0
  %415 = vmatpush2.bf16.msra.mxu0 0
  %416 = vmatprep.subr.bf16.mxu0 0
  %417 = vmatpush2.bf16.msra.mxu0 0
  %418 = vmatprep.subr.bf16.mxu0 0
  %419 = vmatpush2.bf16.msra.mxu0 0
  %420 = vmatprep.subr.bf16.mxu0 0
  %421 = vmatpush2.bf16.msra.mxu0 0
  %422 = vmatprep.subr.bf16.mxu0 0
  %423 = vmatpush2.bf16.msra.mxu0 0
  %424 = vmatprep.subr.bf16.mxu0 0
  %425 = vmatpush2.bf16.msra.mxu0 0
  %426 = vmatprep.subr.bf16.mxu0 0
  %427 = vmatpush2.bf16.msra.mxu0 0
  %428 = vmatprep.mubr.bf16.mxu0 0
  %429 = vmatmul.mubr.bf16.gmra.mxu0 %v391
  %v430 = vpop.f32.mrf.mxu0
  %v431 = vadd.f32 %v363, %v430
  %v432 = vpop.f32.mrf.mxu0
  %v433 = vpop.f32.mrf.mxu0
  %v434 = vadd.f32 %v368, %v433
  %v435 = vpop.f32.mrf.mxu0
  %436 = vmatprep.mubr.bf16.mxu0 0
  %437 = vmatmul.mubr.bf16.gmra.mxu0 %v394
  %v438 = vpop.f32.mrf.mxu0
  %v439 = vadd.f32 %v373, %v438
  %v440 = vpop.f32.mrf.mxu0
  %v441 = vpop.f32.mrf.mxu0
  %v442 = vadd.f32 %v378, %v441
  %v443 = vpop.f32.mrf.mxu0
  %444 = vdwg.mxu0
  %v445 = vmax.f32 %v431, 0.0
  %v446 = vmax.f32 %v434, 0.0
  %v447 = vmax.f32 %v439, 0.0
  %v448 = vmax.f32 %v442, 0.0
  %v449 = vld [vmem:[%s2 + $0x18] sm:$0xff]
  %v450 = vld [vmem:[%s2 + $0x40] sm:$0xff]
  %v451 = vld [vmem:[%s2 + $0x68] sm:$0xff]
  %v452 = vld [vmem:[%s2 + $0x90] sm:$0xff]
  %454 = vset.pattern.permute.xlu0 0
  %455 = vperm.xlu0 %454, %v449
  %v456 = vpop.permute.xlu0 %455
  %459 = vset.pattern.permute.xlu0 0
  %460 = vperm.xlu0 %459, %v450
  %v461 = vpop.permute.xlu0 %460
  %464 = vset.pattern.permute.xlu0 0
  %465 = vperm.xlu0 %464, %v451
  %v466 = vpop.permute.xlu0 %465
  %469 = vset.pattern.permute.xlu0 0
  %470 = vperm.xlu0 %469, %v452
  %v471 = vpop.permute.xlu0 %470
  %v473 = vmul.f32 %v445, %v456
  %v474 = vmul.f32 %v446, %v461
  %v475 = vmul.f32 %v447, %v466
  %v476 = vmul.f32 %v448, %v471
  %v477 = vadd.f32 %v473, %v474
  %v478 = vadd.f32 %v477, %v475
  %v479 = vadd.f32 %v478, %v476
  %v480 = vrot.slane %v479, 4
  %v481 = vadd.f32 %v479, %v480
  %v482 = vrot.slane %v481, 2
  %v483 = vadd.f32 %v481, %v482
  %v484 = vrot.slane %v483, 1
  %v485 = vadd.f32 %v483, %v484
  %v486 = vld [vmem:[%s2 + $0x20] ss:$0 sm:$0xff]
  %488 = vset.pattern.permute.xlu0 0
  %489 = vperm.xlu0 %488, %v486
  %v490 = vpop.permute.xlu0 %489
  %v492 = vadd.f32 %v485, %v490
  %493 = vst [vmem:[%s3] sm:$0x1] %v492
  // Predicated region
  $region14: #{iris_classification_forward.1} parent=0 // pred_check
    _
  $region15: #{iris_classification_forward.1} parent=0 // pred_check_branch
    %495 = sbr.rel (0) target = $region17
  $region16: #{iris_classification_forward.1} parent=0 // pred_region
    _
  $region17: #{iris_classification_forward.1} parent=0 // pred_fallthru
    _
  // Predicated region
  $region18: #{iris_classification_forward.1} parent=0 // pred_check
    _
  $region19: #{iris_classification_forward.1} parent=0 // pred_check_branch
    %497 = sbr.rel (0) target = $region21
  $region20: #{iris_classification_forward.1} parent=0 // pred_region
    _
  $region21: #{iris_classification_forward.1} parent=0 // pred_fallthru
    _

</llo_original>
